<compile_context>
chip_gen: v6e
topology: v6e:2x2x1
jax: 0.10.0
libtpu: 0.0.40
codegen_flags: <defaults>
</compile_context>

<pallas_src>
import functools

import jax
import jax.numpy as jnp
from jax.experimental import pallas as pl
from jax.experimental.pallas import tpu as pltpu

ROW_ALIGN = 32   # batch-tile row alignment; legal for both f32 (8) and bf16 (16) sublane tiles


def _round_up(x, m):
    return (x + m - 1) // m * m


def _leaky_relu(v, slope):
    return jnp.where(v >= 0, v, slope * v)


def generator_mlp_kernel(x_ref,
                         w1_ref, b1_ref,
                         w2_ref, b2_ref,
                         w3_ref, b3_ref,
                         w4_ref, b4_ref,
                         o_ref, *, precision):
    """Fused 4-layer Generator MLP on one (TB, n1) activation tile.

    Matmul operands are cast to the weights' dtype (bf16 default / f32 option)
    with f32 accumulation; bias add, LeakyReLU and tanh stay in f32 (v5e-safe).
    The LeakyReLU(0.2) that appears twice in the Sequential is applied twice.
    """
    mxu_dt = w1_ref.dtype

    def lin(h, w_ref, b_ref):
        return jnp.dot(h.astype(mxu_dt), w_ref[...],
                       preferred_element_type=jnp.float32,
                       precision=precision) + b_ref[...]

    h = _leaky_relu(lin(x_ref[...], w1_ref, b1_ref), 0.2)
    h = _leaky_relu(lin(h, w2_ref, b2_ref), 0.2)
    h = _leaky_relu(_leaky_relu(lin(h, w3_ref, b3_ref), 0.2), 0.2)
    o_ref[...] = jnp.tanh(lin(h, w4_ref, b4_ref)).astype(o_ref.dtype)


@functools.partial(jax.jit, static_argnames=("tile_b", "mxu_dtype", "act_dtype"))
def generator_forward(x, params, *, tile_b=512,
                      mxu_dtype=jnp.bfloat16, act_dtype=jnp.float32):
    """Batch-tiled Generator forward.

    x: (B, n1).  params: logical-shape weights (in,out) and biases (1,out), f32.
    mxu_dtype: matmul operand dtype (bf16 default; f32 pins HIGHEST precision).
    act_dtype: activation I/O dtype in HBM (f32 default; bf16 halves act traffic).
    """
    B, n1 = x.shape
    w1, b1, w2, b2, w3, b3, w4, b4 = params
    n2, n3 = w1.shape[1], w2.shape[1]

    # Grid: >= 2 steps when the batch allows (shards across v7x's 2 TensorCores);
    # tile sized to the batch so padding is at most ROW_ALIGN rows per tile.
    nt = max(pl.cdiv(B, tile_b), 2 if B > ROW_ALIGN else 1)
    tb = _round_up(pl.cdiv(B, nt), ROW_ALIGN)
    nt = pl.cdiv(B, tb)
    b_pad = nt * tb

    xf = x.astype(act_dtype)
    if b_pad != B:                                 # tiny batch-only pad (<= 32 rows/tile)
        xf = jnp.pad(xf, ((0, b_pad - B), (0, 0)))

    ws = [w.astype(mxu_dtype) for w in (w1, w2, w3, w4)]
    bs = [b.astype(jnp.float32) for b in (b1, b2, b3, b4)]

    act_spec = pl.BlockSpec((tb, n1), lambda i: (i, 0))
    out_spec = pl.BlockSpec((tb, n1), lambda i: (i, 0))

    def res_spec(a):       # grid-invariant block: stays VMEM-resident across all steps
        return pl.BlockSpec(a.shape, lambda i: (0, 0))

    param_bytes = sum(int(a.size) * a.dtype.itemsize for a in ws + bs)
    act_bytes = b_pad * n1 * jnp.dtype(act_dtype).itemsize
    cost = pl.CostEstimate(
        flops=2 * b_pad * (n1 * n2 + n2 * n3 + n3 * n2 + n2 * n1),
        transcendentals=b_pad * n1,                     # tanh
        bytes_accessed=2 * act_bytes + param_bytes,     # x in + out + params
    )

    precision = (jax.lax.Precision.HIGHEST
                 if jnp.dtype(mxu_dtype) == jnp.dtype(jnp.float32)
                 else jax.lax.Precision.DEFAULT)

    out = pl.pallas_call(
        functools.partial(generator_mlp_kernel, precision=precision),
        grid=(nt,),
        in_specs=[act_spec,
                  res_spec(ws[0]), res_spec(bs[0]),
                  res_spec(ws[1]), res_spec(bs[1]),
                  res_spec(ws[2]), res_spec(bs[2]),
                  res_spec(ws[3]), res_spec(bs[3])],
        out_specs=out_spec,
        out_shape=jax.ShapeDtypeStruct((b_pad, n1), act_dtype),
        compiler_params=pltpu.CompilerParams(
            dimension_semantics=("parallel",)),
        cost_estimate=cost,
    )(xf, ws[0], bs[0], ws[1], bs[1], ws[2], bs[2], ws[3], bs[3])

    return out[:B] if b_pad != B else out


def init_params(key, n1, n2, n3):
    """weight_init(): Linear weights ~ N(0, 1.5), biases = 0 (logical shapes)."""
    ks = jax.random.split(key, 4)

    def lin(k, d_in, d_out):
        w = 1.5 * jax.random.normal(k, (d_in, d_out), dtype=jnp.float32)
        b = jnp.zeros((1, d_out), dtype=jnp.float32)
        return w, b

    w1, b1 = lin(ks[0], n1, n2)
    w2, b2 = lin(ks[1], n2, n3)
    w3, b3 = lin(ks[2], n3, n2)
    w4, b4 = lin(ks[3], n2, n1)
    return (w1, b1, w2, b2, w3, b3, w4, b4)


def reference_forward(x, params, *, mxu_dtype=jnp.float32, precision=None):
    """Pure-JAX reference, two-pass LeakyReLU, matching operand dtype/precision."""
    (w1, b1, w2, b2, w3, b3, w4, b4) = params

    def lin(h, w, b):
        return jnp.dot(h.astype(mxu_dtype), w.astype(mxu_dtype),
                       preferred_element_type=jnp.float32,
                       precision=precision) + b

    h = _leaky_relu(lin(x, w1, b1), 0.2)
    h = _leaky_relu(lin(h, w2, b2), 0.2)
    h = _leaky_relu(_leaky_relu(lin(h, w3, b3), 0.2), 0.2)  # activation applied twice
    return jnp.tanh(lin(h, w4, b4))


if __name__ == "__main__":
    # para: model_flag=1, mat_shape=(4, 8) -> n1 = 32; increment = 32 -> n2 = 64, n3 = 128
    mat_shape = (4, 8)
    increment = 32
    n1 = mat_shape[0] * mat_shape[1]
    n2 = n1 + increment
    n3 = n1 + increment * 3
    batch = 256          # small, but exercises a 2-step "parallel" grid (2 x 128 rows)

    key = jax.random.PRNGKey(0)
    k_params, k_x = jax.random.split(key)
    params = init_params(k_params, n1, n2, n3)
    x = jax.random.normal(k_x, (batch, n1), dtype=jnp.float32)

    # 1) Default path: bf16 MXU operands, f32 accumulation / elementwise, f32 I/O.
    #    Compare against a reference using the same bf16 operand quantization.
    out_bf = jax.block_until_ready(generator_forward(x, params))
    ref_bf = reference_forward(x, params, mxu_dtype=jnp.bfloat16)
    assert out_bf.shape == (batch, n1)
    err = float(jnp.max(jnp.abs(out_bf - ref_bf)))
    assert err < 2e-2, f"bf16-MXU path mismatch: max abs diff = {err}"

    # 2) f32 MXU path (precision pinned to HIGHEST inside the kernel): near-exact
    #    parity with the HIGHEST-precision pure-JAX reference.
    out_f32 = jax.block_until_ready(
        generator_forward(x, params, mxu_dtype=jnp.float32))
    ref_f32 = reference_forward(x, params, mxu_dtype=jnp.float32,
                                precision=jax.lax.Precision.HIGHEST)
    assert out_f32.shape == (batch, n1)
    err = float(jnp.max(jnp.abs(out_f32 - ref_f32)))
    assert err < 2e-3, f"f32-MXU path mismatch: max abs diff = {err}"

    # 3) bf16 activation I/O (v5e HBM-bound option): compare against a reference
    #    fed the same bf16-quantized input and bf16 matmul operands.
    x_bf16 = x.astype(jnp.bfloat16)
    out_io = jax.block_until_ready(
        generator_forward(x_bf16, params, act_dtype=jnp.bfloat16))
    assert out_io.shape == (batch, n1) and out_io.dtype == jnp.bfloat16
    ref_io = reference_forward(x_bf16.astype(jnp.float32), params,
                               mxu_dtype=jnp.bfloat16)
    err = float(jnp.max(jnp.abs(out_io.astype(jnp.float32) - ref_io)))
    assert err < 5e-2, f"bf16-I/O path mismatch: max abs diff = {err}"
    assert bool(jnp.all(jnp.isfinite(out_io.astype(jnp.float32))))

    print("KERNEL_OK")
</pallas_src>

<mosaic_0001>
module attributes {stable_mosaic.version = 11 : i64} {
  func.func @generator_mlp_kernel(%arg0: i32, %arg1: memref<128x32xf32, #tpu.memory_space<vmem>>, %arg2: memref<32x64xbf16, #tpu.memory_space<vmem>>, %arg3: memref<1x64xf32, #tpu.memory_space<vmem>>, %arg4: memref<64x128xbf16, #tpu.memory_space<vmem>>, %arg5: memref<1x128xf32, #tpu.memory_space<vmem>>, %arg6: memref<128x64xbf16, #tpu.memory_space<vmem>>, %arg7: memref<1x64xf32, #tpu.memory_space<vmem>>, %arg8: memref<64x32xbf16, #tpu.memory_space<vmem>>, %arg9: memref<1x32xf32, #tpu.memory_space<vmem>>, %arg10: memref<128x32xf32, #tpu.memory_space<vmem>>) attributes {dimension_semantics = [#tpu.dimension_semantics<parallel>], iteration_bounds = array<i64: 2>, scalar_prefetch = 0 : i64, scratch_operands = 0 : i64, tpu.core_type = #tpu.core_type<tc>, window_params = [{transform_indices = @transform_0, window_bounds = array<i64: 128, 32>}, {pipeline_mode = #tpu.pipeline_mode<synchronous>, transform_indices = @transform_1, window_bounds = array<i64: 32, 64>}, {pipeline_mode = #tpu.pipeline_mode<synchronous>, transform_indices = @transform_2, window_bounds = array<i64: 1, 64>}, {pipeline_mode = #tpu.pipeline_mode<synchronous>, transform_indices = @transform_3, window_bounds = array<i64: 64, 128>}, {pipeline_mode = #tpu.pipeline_mode<synchronous>, transform_indices = @transform_4, window_bounds = array<i64: 1, 128>}, {pipeline_mode = #tpu.pipeline_mode<synchronous>, transform_indices = @transform_5, window_bounds = array<i64: 128, 64>}, {pipeline_mode = #tpu.pipeline_mode<synchronous>, transform_indices = @transform_6, window_bounds = array<i64: 1, 64>}, {pipeline_mode = #tpu.pipeline_mode<synchronous>, transform_indices = @transform_7, window_bounds = array<i64: 64, 32>}, {pipeline_mode = #tpu.pipeline_mode<synchronous>, transform_indices = @transform_8, window_bounds = array<i64: 1, 32>}, {transform_indices = @transform_9, window_bounds = array<i64: 128, 32>}]} {
    %c0 = arith.constant 0 : index
    %c0_0 = arith.constant 0 : index
    %0 = vector.load %arg1[%c0, %c0_0] : memref<128x32xf32, #tpu.memory_space<vmem>>, vector<128x32xf32>
    %1 = arith.truncf %0 : vector<128x32xf32> to vector<128x32xbf16>
    %c0_1 = arith.constant 0 : index
    %c0_2 = arith.constant 0 : index
    %2 = vector.load %arg2[%c0_1, %c0_2] : memref<32x64xbf16, #tpu.memory_space<vmem>>, vector<32x64xbf16>
    %cst = arith.constant dense<0.000000e+00> : vector<128x64xf32>
    %3 = tpu.matmul %1, %2, %cst {dimension_numbers = #tpu.dot_dimension_numbers<[1], [0], [0], [1], [0, 0, 1, 1], [], []>} : vector<128x32xbf16>, vector<32x64xbf16>, vector<128x64xf32> -> vector<128x64xf32>
    %c0_3 = arith.constant 0 : index
    %c0_4 = arith.constant 0 : index
    %4 = vector.load %arg3[%c0_3, %c0_4] : memref<1x64xf32, #tpu.memory_space<vmem>>, vector<1x64xf32>
    %5 = vector.broadcast %4 : vector<1x64xf32> to vector<128x64xf32>
    %6 = arith.addf %3, %5 : vector<128x64xf32>
    %cst_5 = arith.constant 0.000000e+00 : f32
    %7 = vector.broadcast %cst_5 : f32 to vector<128x64xf32>
    %8 = arith.cmpf oge, %6, %7 : vector<128x64xf32>
    %cst_6 = arith.constant 2.000000e-01 : f32
    %9 = vector.broadcast %cst_6 : f32 to vector<128x64xf32>
    %10 = arith.mulf %9, %6 : vector<128x64xf32>
    %11 = arith.select %8, %6, %10 : vector<128x64xi1>, vector<128x64xf32>
    %12 = arith.truncf %11 : vector<128x64xf32> to vector<128x64xbf16>
    %c0_7 = arith.constant 0 : index
    %c0_8 = arith.constant 0 : index
    %13 = vector.load %arg4[%c0_7, %c0_8] : memref<64x128xbf16, #tpu.memory_space<vmem>>, vector<64x128xbf16>
    %cst_9 = arith.constant dense<0.000000e+00> : vector<128x128xf32>
    %14 = tpu.matmul %12, %13, %cst_9 {dimension_numbers = #tpu.dot_dimension_numbers<[1], [0], [0], [1], [0, 0, 1, 1], [], []>} : vector<128x64xbf16>, vector<64x128xbf16>, vector<128x128xf32> -> vector<128x128xf32>
    %c0_10 = arith.constant 0 : index
    %c0_11 = arith.constant 0 : index
    %15 = vector.load %arg5[%c0_10, %c0_11] : memref<1x128xf32, #tpu.memory_space<vmem>>, vector<1x128xf32>
    %16 = vector.broadcast %15 : vector<1x128xf32> to vector<128x128xf32>
    %17 = arith.addf %14, %16 : vector<128x128xf32>
    %cst_12 = arith.constant 0.000000e+00 : f32
    %18 = vector.broadcast %cst_12 : f32 to vector<128x128xf32>
    %19 = arith.cmpf oge, %17, %18 : vector<128x128xf32>
    %cst_13 = arith.constant 2.000000e-01 : f32
    %20 = vector.broadcast %cst_13 : f32 to vector<128x128xf32>
    %21 = arith.mulf %20, %17 : vector<128x128xf32>
    %22 = arith.select %19, %17, %21 : vector<128x128xi1>, vector<128x128xf32>
    %23 = arith.truncf %22 : vector<128x128xf32> to vector<128x128xbf16>
    %c0_14 = arith.constant 0 : index
    %c0_15 = arith.constant 0 : index
    %24 = vector.load %arg6[%c0_14, %c0_15] : memref<128x64xbf16, #tpu.memory_space<vmem>>, vector<128x64xbf16>
    %cst_16 = arith.constant dense<0.000000e+00> : vector<128x64xf32>
    %25 = tpu.matmul %23, %24, %cst_16 {dimension_numbers = #tpu.dot_dimension_numbers<[1], [0], [0], [1], [0, 0, 1, 1], [], []>} : vector<128x128xbf16>, vector<128x64xbf16>, vector<128x64xf32> -> vector<128x64xf32>
    %c0_17 = arith.constant 0 : index
    %c0_18 = arith.constant 0 : index
    %26 = vector.load %arg7[%c0_17, %c0_18] : memref<1x64xf32, #tpu.memory_space<vmem>>, vector<1x64xf32>
    %27 = vector.broadcast %26 : vector<1x64xf32> to vector<128x64xf32>
    %28 = arith.addf %25, %27 : vector<128x64xf32>
    %cst_19 = arith.constant 0.000000e+00 : f32
    %29 = vector.broadcast %cst_19 : f32 to vector<128x64xf32>
    %30 = arith.cmpf oge, %28, %29 : vector<128x64xf32>
    %cst_20 = arith.constant 2.000000e-01 : f32
    %31 = vector.broadcast %cst_20 : f32 to vector<128x64xf32>
    %32 = arith.mulf %31, %28 : vector<128x64xf32>
    %33 = arith.select %30, %28, %32 : vector<128x64xi1>, vector<128x64xf32>
    %cst_21 = arith.constant 0.000000e+00 : f32
    %34 = vector.broadcast %cst_21 : f32 to vector<128x64xf32>
    %35 = arith.cmpf oge, %33, %34 : vector<128x64xf32>
    %cst_22 = arith.constant 2.000000e-01 : f32
    %36 = vector.broadcast %cst_22 : f32 to vector<128x64xf32>
    %37 = arith.mulf %36, %33 : vector<128x64xf32>
    %38 = arith.select %35, %33, %37 : vector<128x64xi1>, vector<128x64xf32>
    %39 = arith.truncf %38 : vector<128x64xf32> to vector<128x64xbf16>
    %c0_23 = arith.constant 0 : index
    %c0_24 = arith.constant 0 : index
    %40 = vector.load %arg8[%c0_23, %c0_24] : memref<64x32xbf16, #tpu.memory_space<vmem>>, vector<64x32xbf16>
    %cst_25 = arith.constant dense<0.000000e+00> : vector<128x32xf32>
    %41 = tpu.matmul %39, %40, %cst_25 {dimension_numbers = #tpu.dot_dimension_numbers<[1], [0], [0], [1], [0, 0, 1, 1], [], []>} : vector<128x64xbf16>, vector<64x32xbf16>, vector<128x32xf32> -> vector<128x32xf32>
    %c0_26 = arith.constant 0 : index
    %c0_27 = arith.constant 0 : index
    %42 = vector.load %arg9[%c0_26, %c0_27] : memref<1x32xf32, #tpu.memory_space<vmem>>, vector<1x32xf32>
    %43 = vector.broadcast %42 : vector<1x32xf32> to vector<128x32xf32>
    %44 = arith.addf %41, %43 : vector<128x32xf32>
    %45 = math.tanh %44 : vector<128x32xf32>
    %c0_28 = arith.constant 0 : index
    %c0_29 = arith.constant 0 : index
    %46 = vector.load %arg10[%c0_28, %c0_29] : memref<128x32xf32, #tpu.memory_space<vmem>>, vector<128x32xf32>
    tpu.vector_store %arg10[%c0_28, %c0_29], %45 {strides = array<i32>} : memref<128x32xf32, #tpu.memory_space<vmem>>, vector<128x32xf32>,
    return
  }
  func.func @transform_0(%arg0: i32) -> (i32, i32) {
    %c0_i32 = arith.constant 0 : i32
    %c0_i32_0 = arith.constant 0 : i32
    return %arg0, %c0_i32 : i32, i32
  }
  func.func @transform_1(%arg0: i32) -> (i32, i32) {
    %c0_i32 = arith.constant 0 : i32
    %c0_i32_0 = arith.constant 0 : i32
    %c0_i32_1 = arith.constant 0 : i32
    return %c0_i32, %c0_i32_0 : i32, i32
  }
  func.func @transform_2(%arg0: i32) -> (i32, i32) {
    %c0_i32 = arith.constant 0 : i32
    %c0_i32_0 = arith.constant 0 : i32
    %c0_i32_1 = arith.constant 0 : i32
    return %c0_i32, %c0_i32_0 : i32, i32
  }
  func.func @transform_3(%arg0: i32) -> (i32, i32) {
    %c0_i32 = arith.constant 0 : i32
    %c0_i32_0 = arith.constant 0 : i32
    %c0_i32_1 = arith.constant 0 : i32
    return %c0_i32, %c0_i32_0 : i32, i32
  }
  func.func @transform_4(%arg0: i32) -> (i32, i32) {
    %c0_i32 = arith.constant 0 : i32
    %c0_i32_0 = arith.constant 0 : i32
    %c0_i32_1 = arith.constant 0 : i32
    return %c0_i32, %c0_i32_0 : i32, i32
  }
  func.func @transform_5(%arg0: i32) -> (i32, i32) {
    %c0_i32 = arith.constant 0 : i32
    %c0_i32_0 = arith.constant 0 : i32
    %c0_i32_1 = arith.constant 0 : i32
    return %c0_i32, %c0_i32_0 : i32, i32
  }
  func.func @transform_6(%arg0: i32) -> (i32, i32) {
    %c0_i32 = arith.constant 0 : i32
    %c0_i32_0 = arith.constant 0 : i32
    %c0_i32_1 = arith.constant 0 : i32
    return %c0_i32, %c0_i32_0 : i32, i32
  }
  func.func @transform_7(%arg0: i32) -> (i32, i32) {
    %c0_i32 = arith.constant 0 : i32
    %c0_i32_0 = arith.constant 0 : i32
    %c0_i32_1 = arith.constant 0 : i32
    return %c0_i32, %c0_i32_0 : i32, i32
  }
  func.func @transform_8(%arg0: i32) -> (i32, i32) {
    %c0_i32 = arith.constant 0 : i32
    %c0_i32_0 = arith.constant 0 : i32
    %c0_i32_1 = arith.constant 0 : i32
    return %c0_i32, %c0_i32_0 : i32, i32
  }
  func.func @transform_9(%arg0: i32) -> (i32, i32) {
    %c0_i32 = arith.constant 0 : i32
    %c0_i32_0 = arith.constant 0 : i32
    return %arg0, %c0_i32 : i32, i32
  }
}

</mosaic_0001>

<llo_original>
// kernel: generator_forward.1
$region0: #{generator_forward.1}
  #allocation0 [shape = 'u32[]', space=smem, size = 0x4, offset = 0x4, fixed_abs, tag = 'smem constant byte address 0x4 - core index']
  #allocation1 [shape = 'u32[144,128]{1,0:T(1,128)}', space=vmem, size = 0x12000, scoped, tag = 'internal scratch']
  %s0 = inlined_call_operand.vmem [shape: f32[256,32], index: 0, kind: input, shape index: {}]
  %s1 = inlined_call_operand.vmem [shape: bf16[32,64], index: 1, kind: input, shape index: {}]
  %s2 = inlined_call_operand.vmem [shape: f32[1,64], index: 2, kind: input, shape index: {}]
  %s3 = inlined_call_operand.vmem [shape: bf16[64,128], index: 3, kind: input, shape index: {}]
  %s4 = inlined_call_operand.vmem [shape: f32[1,128], index: 4, kind: input, shape index: {}]
  %s5 = inlined_call_operand.vmem [shape: bf16[128,64], index: 5, kind: input, shape index: {}]
  %s6 = inlined_call_operand.vmem [shape: f32[1,64], index: 6, kind: input, shape index: {}]
  %s7 = inlined_call_operand.vmem [shape: bf16[64,32], index: 7, kind: input, shape index: {}]
  %s8 = inlined_call_operand.vmem [shape: f32[1,32], index: 8, kind: input, shape index: {}]
  %s9 = inlined_call_operand.vmem [shape: f32[256,32], index: 9, kind: output, shape index: {}]
  %s10 = sld [smem:[#allocation0]]
  $region69: #{generator_forward.1} parent=0
    _
  %s12 = ssub.s32 1, %s10
  %s13 = scalar_select 0, %s12, %s10
  loop: start=0, step=1, limit=4
  $region2: #{generator_forward.1} parent=0 // loop_pre_header
    _
  $region3: #{generator_forward.1} parent=0 // loop_header
    %s15 = sphi 0, %s19
    %p16 = scmp.ge.s32.totalorder %s15, 4
    %s25 = sphi 0, %s27
    %s28 = sphi 0, %s25
    %s29 = sphi 0, %s28
    %s45 = sphi 0, %s29
    %s49 = sphi 0, %s49
    %s51 = sphi 0, %s49
    %s52 = sphi 0, %s51
    %s66 = sphi 0, %s52
    %s70 = sphi 0, %s70
    %s72 = sphi 0, %s70
    %s73 = sphi 0, %s72
    %s87 = sphi 0, %s73
    %s91 = sphi 0, %s91
    %s93 = sphi 0, %s91
    %s94 = sphi 0, %s93
    %s108 = sphi 0, %s94
    %s112 = sphi 0, %s112
    %s114 = sphi 0, %s112
    %s115 = sphi 0, %s114
    %s129 = sphi 0, %s115
    %s133 = sphi 0, %s133
    %s135 = sphi 0, %s133
    %s136 = sphi 0, %s135
    %s150 = sphi 0, %s136
    %s154 = sphi 0, %s154
    %s156 = sphi 0, %s154
    %s157 = sphi 0, %s156
    %s171 = sphi 0, %s157
    %s175 = sphi 0, %s175
    %s177 = sphi 0, %s175
    %s178 = sphi 0, %s177
    %s192 = sphi 0, %s178
    %s196 = sphi 0, %s196
    %s198 = sphi 0, %s196
    %s199 = sphi 0, %s198
    %s213 = sphi 0, %s199
    %s219 = sphi 0, %s221
    %s222 = sphi 0, %s219
    %s223 = sphi 0, %s222
    %s239 = sphi 0, %s223
  $region4: #{generator_forward.1} parent=0 // loop_header_branch
    %18 = sbr.rel (%p16) target = $region8
  $region5: #{generator_forward.1} parent=0 // loop_body
    %s20 = ssub.s32 %s15, 1
    %s21 = ssub.s32 %s15, 2
    %s22 = sadd.s32 %s15, 1
    %s23 = ssub.s32 %s15, %s22
    %p24 = scmp.eq.s32.totalorder %s23, 0
    %s26 = sadd.s32 %s25, 1
    %s27 = scalar_select %p24, %s25, %s26
    %p30 = pneg %p24
    %p31 = scmp.eq.s32.totalorder %s15, 1
    %p32 = por %p30, %p31
    %p33 = scmp.ne.s32.totalorder %s25, %s28
    %p34 = scmp.eq.s32.totalorder %s15, 0
    %p35 = por %p33, %p34
    %p36 = scmp.ne.s32.totalorder %s25, %s28
    %p37 = scmp.eq.s32.totalorder %s20, 1
    %p38 = por %p36, %p37
    %p39 = scmp.ne.s32.totalorder %s28, %s29
    %p40 = scmp.eq.s32.totalorder %s20, 0
    %p41 = por %p39, %p40
    %p42 = scmp.ne.s32.totalorder %s28, %s29
    %p43 = scmp.eq.s32.totalorder %s21, 1
    %p44 = por %p42, %p43
    %p46 = scmp.ne.s32.totalorder %s29, %s45
    %p47 = scmp.eq.s32.totalorder %s21, 0
    %p48 = por %p46, %p47
    %s50 = sadd.s32 %s49, 1
    %p53 = scmp.eq.s32.totalorder %s15, 1
    %p54 = scmp.ne.s32.totalorder %s49, %s51
    %p55 = scmp.eq.s32.totalorder %s15, 0
    %p56 = por %p54, %p55
    %p57 = scmp.ne.s32.totalorder %s49, %s51
    %p58 = scmp.eq.s32.totalorder %s20, 1
    %p59 = por %p57, %p58
    %p60 = scmp.ne.s32.totalorder %s51, %s52
    %p61 = scmp.eq.s32.totalorder %s20, 0
    %p62 = por %p60, %p61
    %p63 = scmp.ne.s32.totalorder %s51, %s52
    %p64 = scmp.eq.s32.totalorder %s21, 1
    %p65 = por %p63, %p64
    %p67 = scmp.ne.s32.totalorder %s52, %s66
    %p68 = scmp.eq.s32.totalorder %s21, 0
    %p69 = por %p67, %p68
    %s71 = sadd.s32 %s70, 1
    %p74 = scmp.eq.s32.totalorder %s15, 1
    %p75 = scmp.ne.s32.totalorder %s70, %s72
    %p76 = scmp.eq.s32.totalorder %s15, 0
    %p77 = por %p75, %p76
    %p78 = scmp.ne.s32.totalorder %s70, %s72
    %p79 = scmp.eq.s32.totalorder %s20, 1
    %p80 = por %p78, %p79
    %p81 = scmp.ne.s32.totalorder %s72, %s73
    %p82 = scmp.eq.s32.totalorder %s20, 0
    %p83 = por %p81, %p82
    %p84 = scmp.ne.s32.totalorder %s72, %s73
    %p85 = scmp.eq.s32.totalorder %s21, 1
    %p86 = por %p84, %p85
    %p88 = scmp.ne.s32.totalorder %s73, %s87
    %p89 = scmp.eq.s32.totalorder %s21, 0
    %p90 = por %p88, %p89
    %s92 = sadd.s32 %s91, 1
    %p95 = scmp.eq.s32.totalorder %s15, 1
    %p96 = scmp.ne.s32.totalorder %s91, %s93
    %p97 = scmp.eq.s32.totalorder %s15, 0
    %p98 = por %p96, %p97
    %p99 = scmp.ne.s32.totalorder %s91, %s93
    %p100 = scmp.eq.s32.totalorder %s20, 1
    %p101 = por %p99, %p100
    %p102 = scmp.ne.s32.totalorder %s93, %s94
    %p103 = scmp.eq.s32.totalorder %s20, 0
    %p104 = por %p102, %p103
    %p105 = scmp.ne.s32.totalorder %s93, %s94
    %p106 = scmp.eq.s32.totalorder %s21, 1
    %p107 = por %p105, %p106
    %p109 = scmp.ne.s32.totalorder %s94, %s108
    %p110 = scmp.eq.s32.totalorder %s21, 0
    %p111 = por %p109, %p110
    %s113 = sadd.s32 %s112, 1
    %p116 = scmp.eq.s32.totalorder %s15, 1
    %p117 = scmp.ne.s32.totalorder %s112, %s114
    %p118 = scmp.eq.s32.totalorder %s15, 0
    %p119 = por %p117, %p118
    %p120 = scmp.ne.s32.totalorder %s112, %s114
    %p121 = scmp.eq.s32.totalorder %s20, 1
    %p122 = por %p120, %p121
    %p123 = scmp.ne.s32.totalorder %s114, %s115
    %p124 = scmp.eq.s32.totalorder %s20, 0
    %p125 = por %p123, %p124
    %p126 = scmp.ne.s32.totalorder %s114, %s115
    %p127 = scmp.eq.s32.totalorder %s21, 1
    %p128 = por %p126, %p127
    %p130 = scmp.ne.s32.totalorder %s115, %s129
    %p131 = scmp.eq.s32.totalorder %s21, 0
    %p132 = por %p130, %p131
    %s134 = sadd.s32 %s133, 1
    %p137 = scmp.eq.s32.totalorder %s15, 1
    %p138 = scmp.ne.s32.totalorder %s133, %s135
    %p139 = scmp.eq.s32.totalorder %s15, 0
    %p140 = por %p138, %p139
    %p141 = scmp.ne.s32.totalorder %s133, %s135
    %p142 = scmp.eq.s32.totalorder %s20, 1
    %p143 = por %p141, %p142
    %p144 = scmp.ne.s32.totalorder %s135, %s136
    %p145 = scmp.eq.s32.totalorder %s20, 0
    %p146 = por %p144, %p145
    %p147 = scmp.ne.s32.totalorder %s135, %s136
    %p148 = scmp.eq.s32.totalorder %s21, 1
    %p149 = por %p147, %p148
    %p151 = scmp.ne.s32.totalorder %s136, %s150
    %p152 = scmp.eq.s32.totalorder %s21, 0
    %p153 = por %p151, %p152
    %s155 = sadd.s32 %s154, 1
    %p158 = scmp.eq.s32.totalorder %s15, 1
    %p159 = scmp.ne.s32.totalorder %s154, %s156
    %p160 = scmp.eq.s32.totalorder %s15, 0
    %p161 = por %p159, %p160
    %p162 = scmp.ne.s32.totalorder %s154, %s156
    %p163 = scmp.eq.s32.totalorder %s20, 1
    %p164 = por %p162, %p163
    %p165 = scmp.ne.s32.totalorder %s156, %s157
    %p166 = scmp.eq.s32.totalorder %s20, 0
    %p167 = por %p165, %p166
    %p168 = scmp.ne.s32.totalorder %s156, %s157
    %p169 = scmp.eq.s32.totalorder %s21, 1
    %p170 = por %p168, %p169
    %p172 = scmp.ne.s32.totalorder %s157, %s171
    %p173 = scmp.eq.s32.totalorder %s21, 0
    %p174 = por %p172, %p173
    %s176 = sadd.s32 %s175, 1
    %p179 = scmp.eq.s32.totalorder %s15, 1
    %p180 = scmp.ne.s32.totalorder %s175, %s177
    %p181 = scmp.eq.s32.totalorder %s15, 0
    %p182 = por %p180, %p181
    %p183 = scmp.ne.s32.totalorder %s175, %s177
    %p184 = scmp.eq.s32.totalorder %s20, 1
    %p185 = por %p183, %p184
    %p186 = scmp.ne.s32.totalorder %s177, %s178
    %p187 = scmp.eq.s32.totalorder %s20, 0
    %p188 = por %p186, %p187
    %p189 = scmp.ne.s32.totalorder %s177, %s178
    %p190 = scmp.eq.s32.totalorder %s21, 1
    %p191 = por %p189, %p190
    %p193 = scmp.ne.s32.totalorder %s178, %s192
    %p194 = scmp.eq.s32.totalorder %s21, 0
    %p195 = por %p193, %p194
    %s197 = sadd.s32 %s196, 1
    %p200 = scmp.eq.s32.totalorder %s15, 1
    %p201 = scmp.ne.s32.totalorder %s196, %s198
    %p202 = scmp.eq.s32.totalorder %s15, 0
    %p203 = por %p201, %p202
    %p204 = scmp.ne.s32.totalorder %s196, %s198
    %p205 = scmp.eq.s32.totalorder %s20, 1
    %p206 = por %p204, %p205
    %p207 = scmp.ne.s32.totalorder %s198, %s199
    %p208 = scmp.eq.s32.totalorder %s20, 0
    %p209 = por %p207, %p208
    %p210 = scmp.ne.s32.totalorder %s198, %s199
    %p211 = scmp.eq.s32.totalorder %s21, 1
    %p212 = por %p210, %p211
    %p214 = scmp.ne.s32.totalorder %s199, %s213
    %p215 = scmp.eq.s32.totalorder %s21, 0
    %p216 = por %p214, %p215
    %s217 = ssub.s32 %s15, %s22
    %p218 = scmp.eq.s32.totalorder %s217, 0
    %s220 = sadd.s32 %s219, 1
    %s221 = scalar_select %p218, %s219, %s220
    %p224 = pneg %p218
    %p225 = scmp.eq.s32.totalorder %s15, 1
    %p226 = por %p224, %p225
    %p227 = scmp.ne.s32.totalorder %s219, %s222
    %p228 = scmp.eq.s32.totalorder %s15, 0
    %p229 = por %p227, %p228
    %p230 = scmp.ne.s32.totalorder %s219, %s222
    %p231 = scmp.eq.s32.totalorder %s20, 1
    %p232 = por %p230, %p231
    %p233 = scmp.ne.s32.totalorder %s222, %s223
    %p234 = scmp.eq.s32.totalorder %s20, 0
    %p235 = por %p233, %p234
    %p236 = scmp.ne.s32.totalorder %s222, %s223
    %p237 = scmp.eq.s32.totalorder %s21, 1
    %p238 = por %p236, %p237
    %p240 = scmp.ne.s32.totalorder %s223, %s239
    %p241 = scmp.eq.s32.totalorder %s21, 0
    %p242 = por %p240, %p241
    %p243 = scmp.le.s32.totalorder 1, %s15
    %p244 = scmp.lt.s32.totalorder %s15, 3
    %p245 = pnand %p243, %p244
    %p246 = pneg %p245
    // Predicated region
    $region9: #{generator_forward.1} parent=5 // pred_check
      _
    $region10: #{generator_forward.1} parent=5 // pred_check_branch
      %248 = sbr.rel (%p245) target = $region12
    $region11: #{generator_forward.1} parent=5 // pred_region
      %s249 = ssub.s32 %s15, 1
      // Predicated region
      $region13: #{generator_forward.1} parent=11 // pred_check
        %p250 = pneg %p62
      $region14: #{generator_forward.1} parent=11 // pred_check_branch
        %252 = sbr.rel (%p250) target = $region16
      $region15: #{generator_forward.1} parent=11 // pred_region
        _
      $region16: #{generator_forward.1} parent=11 // pred_fallthru
        _
      // Predicated region
      $region17: #{generator_forward.1} parent=11 // pred_check
        %p253 = pneg %p83
      $region18: #{generator_forward.1} parent=11 // pred_check_branch
        %255 = sbr.rel (%p253) target = $region20
      $region19: #{generator_forward.1} parent=11 // pred_region
        _
      $region20: #{generator_forward.1} parent=11 // pred_fallthru
        _
      // Predicated region
      $region21: #{generator_forward.1} parent=11 // pred_check
        %p256 = pneg %p104
      $region22: #{generator_forward.1} parent=11 // pred_check_branch
        %258 = sbr.rel (%p256) target = $region24
      $region23: #{generator_forward.1} parent=11 // pred_region
        _
      $region24: #{generator_forward.1} parent=11 // pred_fallthru
        _
      // Predicated region
      $region25: #{generator_forward.1} parent=11 // pred_check
        %p259 = pneg %p125
      $region26: #{generator_forward.1} parent=11 // pred_check_branch
        %261 = sbr.rel (%p259) target = $region28
      $region27: #{generator_forward.1} parent=11 // pred_region
        _
      $region28: #{generator_forward.1} parent=11 // pred_fallthru
        _
      // Predicated region
      $region29: #{generator_forward.1} parent=11 // pred_check
        %p262 = pneg %p146
      $region30: #{generator_forward.1} parent=11 // pred_check_branch
        %264 = sbr.rel (%p262) target = $region32
      $region31: #{generator_forward.1} parent=11 // pred_region
        _
      $region32: #{generator_forward.1} parent=11 // pred_fallthru
        _
      // Predicated region
      $region33: #{generator_forward.1} parent=11 // pred_check
        %p265 = pneg %p167
      $region34: #{generator_forward.1} parent=11 // pred_check_branch
        %267 = sbr.rel (%p265) target = $region36
      $region35: #{generator_forward.1} parent=11 // pred_region
        _
      $region36: #{generator_forward.1} parent=11 // pred_fallthru
        _
      // Predicated region
      $region37: #{generator_forward.1} parent=11 // pred_check
        %p268 = pneg %p188
      $region38: #{generator_forward.1} parent=11 // pred_check_branch
        %270 = sbr.rel (%p268) target = $region40
      $region39: #{generator_forward.1} parent=11 // pred_region
        _
      $region40: #{generator_forward.1} parent=11 // pred_fallthru
        _
      // Predicated region
      $region41: #{generator_forward.1} parent=11 // pred_check
        %p271 = pneg %p209
      $region42: #{generator_forward.1} parent=11 // pred_check_branch
        %273 = sbr.rel (%p271) target = $region44
      $region43: #{generator_forward.1} parent=11 // pred_region
        _
      $region44: #{generator_forward.1} parent=11 // pred_fallthru
        _
    $region12: #{generator_forward.1} parent=5 // pred_fallthru
      _
    %p274 = scmp.lt.s32.totalorder %s15, 2
    // Predicated region
    $region45: #{generator_forward.1} parent=5 // pred_check
      %p275 = pneg %p274
    $region46: #{generator_forward.1} parent=5 // pred_check_branch
      %277 = sbr.rel (%p275) target = $region48
    $region47: #{generator_forward.1} parent=5 // pred_region
      // Predicated region
      $region49: #{generator_forward.1} parent=47 // pred_check
        %p278 = pneg %p35
      $region50: #{generator_forward.1} parent=47 // pred_check_branch
        %280 = sbr.rel (%p278) target = $region52
      $region51: #{generator_forward.1} parent=47 // pred_region
        %s281 = smul.u32 16, %s15
        %p282 = scmp.lt.s32.totalorder %s281, 31
        %s283 = scalar_select %p282, %s281, 31
        %s284 = smul.addr %s283, 8
        %s285 = scalar_lea.vmem %s0, %s284
        %s286 = smul.u32 16, %s15
      $region52: #{generator_forward.1} parent=47 // pred_fallthru
        _
    $region48: #{generator_forward.1} parent=5 // pred_fallthru
      _
    %p287 = scmp.le.s32.totalorder 1, %s15
    %p288 = scmp.lt.s32.totalorder %s15, 3
    %p289 = pnand %p287, %p288
    %p290 = pneg %p289
    // Predicated region
    $region53: #{generator_forward.1} parent=5 // pred_check
      _
    $region54: #{generator_forward.1} parent=5 // pred_check_branch
      %292 = sbr.rel (%p289) target = $region56
    $region55: #{generator_forward.1} parent=5 // pred_region
      %s293 = ssub.s32 %s15, 1
      %s294 = smul.u32 16, %s20
      %p295 = scmp.lt.s32.totalorder %s294, 31
      %s296 = scalar_select %p295, %s294, 31
      %s297 = smul.addr %s296, 8
      %s298 = scalar_lea.vmem %s0, %s297
      %p299 = pneg %p41
      %p300 = pneg %p38
      %p301 = pneg %p62
      %p302 = pneg %p59
      %p303 = pneg %p83
      %p304 = pneg %p80
      %p305 = pneg %p104
      %p306 = pneg %p101
      %p307 = pneg %p125
      %p308 = pneg %p122
      %p309 = pneg %p146
      %p310 = pneg %p143
      %p311 = pneg %p167
      %p312 = pneg %p164
      %p313 = pneg %p188
      %p314 = pneg %p185
      %p315 = pneg %p209
      %p316 = pneg %p206
      %p317 = pneg %p235
      %p318 = pneg %p232
      %s319 = smul.u32 16, %s20
      %p320 = scmp.lt.s32.totalorder %s319, 31
      %s321 = scalar_select %p320, %s319, 31
      %s322 = smul.addr %s321, 8
      %s323 = scalar_lea.vmem %s9, %s322
      %s324 = smul.u32 16, %s20
      %p325 = scmp.lt.s32.totalorder %s324, 31
      %s326 = scalar_select %p325, %s324, 31
      %s327 = smul.addr %s326, 8
      %s328 = scalar_lea.vmem %s0, %s327
      %s329 = smul.u32 16, %s20
      %s330 = smul.u32 16, %s20
      %p331 = scmp.lt.s32.totalorder %s330, 31
      %s332 = scalar_select %p331, %s330, 31
      %s333 = smul.addr %s332, 8
      %s334 = scalar_lea.vmem %s9, %s333
      %s335 = smul.u32 16, %s20
      %v337 = vld [vmem:[%s328] sm:$0xff]
      %v338 = vld [vmem:[%s328 + $0x8] sm:$0xff]
      %v339 = vld [vmem:[%s328 + $0x10] sm:$0xff]
      %v340 = vld [vmem:[%s328 + $0x18] sm:$0xff]
      %v341 = vld [vmem:[%s328 + $0x20] sm:$0xff]
      %v342 = vld [vmem:[%s328 + $0x28] sm:$0xff]
      %v343 = vld [vmem:[%s328 + $0x30] sm:$0xff]
      %v344 = vld [vmem:[%s328 + $0x38] sm:$0xff]
      %v345 = vld [vmem:[%s328 + $0x40] sm:$0xff]
      %v346 = vld [vmem:[%s328 + $0x48] sm:$0xff]
      %v347 = vld [vmem:[%s328 + $0x50] sm:$0xff]
      %v348 = vld [vmem:[%s328 + $0x58] sm:$0xff]
      %v349 = vld [vmem:[%s328 + $0x60] sm:$0xff]
      %v350 = vld [vmem:[%s328 + $0x68] sm:$0xff]
      %v351 = vld [vmem:[%s328 + $0x70] sm:$0xff]
      %v352 = vld [vmem:[%s328 + $0x78] sm:$0xff]
      %v353 = vpack.c.bf16 %v338, %v337
      %v354 = vpack.c.bf16 %v340, %v339
      %v355 = vpack.c.bf16 %v342, %v341
      %v356 = vpack.c.bf16 %v344, %v343
      %v357 = vpack.c.bf16 %v346, %v345
      %v358 = vpack.c.bf16 %v348, %v347
      %v359 = vpack.c.bf16 %v350, %v349
      %v360 = vpack.c.bf16 %v352, %v351
      %v361 = vld [vmem:[%s1] sm:$0xf]
      %v362 = vld [vmem:[%s1 + $0x4] sm:$0xf]
      %v363 = vld [vmem:[%s1 + $0x8] sm:$0xf]
      %v364 = vld [vmem:[%s1 + $0xc] sm:$0xf]
      %v365 = vld [vmem:[%s2] sm:$0x1]
      %v367 = vlaneseq
      %v368 = vshrl.u32 %v367, 7
      %v369 = vsub.s32 0, %v368
      %v370 = vrot.slane %v365, %v369
      %v376 = vunpack.c.l.b16 %v361
      %v377 = vunpack.c.l.b16 %v362
      %v378 = vunpack.c.l.b16 %v363
      %v379 = vunpack.c.l.b16 %v364
      %v380 = vpack.c.b16 %v377, %v376
      %v381 = vpack.c.b16 %v379, %v378
      %vm384 = vcmask 261120
      %v386 = vsel %vm384, %v353, 0
      %v389 = vsel %vm384, %v354, 0
      %v392 = vsel %vm384, %v355, 0
      %v395 = vsel %vm384, %v356, 0
      %v398 = vsel %vm384, %v357, 0
      %v401 = vsel %vm384, %v358, 0
      %v404 = vsel %vm384, %v359, 0
      %v407 = vsel %vm384, %v360, 0
      %409 = vmatprep.subr.bf16.mxu0 0
      %410 = vmatpush1.bf16.msra.mxu0 0
      %411 = vmatprep.subr.bf16.mxu0 0
      %412 = vmatpush1.bf16.msra.mxu0 0
      %413 = vmatprep.subr.bf16.mxu0 0
      %414 = vmatpush1.bf16.msra.mxu0 0
      %415 = vmatprep.subr.bf16.mxu0 0
      %416 = vmatpush1.bf16.msra.mxu0 0
      %417 = vmatprep.subr.bf16.mxu0 0
      %418 = vmatpush1.bf16.msra.mxu0 0
      %419 = vmatprep.subr.bf16.mxu0 0
      %420 = vmatpush1.bf16.msra.mxu0 0
      %421 = vmatprep.subr.bf16.mxu0 0
      %422 = vmatpush1.bf16.msra.mxu0 %v381
      %423 = vmatprep.subr.bf16.mxu0 0
      %424 = vmatpush1.bf16.msra.mxu0 %v380
      %425 = vmatprep.subr.bf16.mxu0 0
      %426 = vmatpush2.bf16.msra.mxu0 0
      %427 = vmatprep.subr.bf16.mxu0 0
      %428 = vmatpush2.bf16.msra.mxu0 0
      %429 = vmatprep.subr.bf16.mxu0 0
      %430 = vmatpush2.bf16.msra.mxu0 0
      %431 = vmatprep.subr.bf16.mxu0 0
      %432 = vmatpush2.bf16.msra.mxu0 0
      %433 = vmatprep.subr.bf16.mxu0 0
      %434 = vmatpush2.bf16.msra.mxu0 0
      %435 = vmatprep.subr.bf16.mxu0 0
      %436 = vmatpush2.bf16.msra.mxu0 0
      %437 = vmatprep.subr.bf16.mxu0 0
      %438 = vmatpush2.bf16.msra.mxu0 0
      %439 = vmatprep.subr.bf16.mxu0 0
      %440 = vmatpush2.bf16.msra.mxu0 0
      %441 = vmatprep.mubr.bf16.mxu0 0
      %442 = vmatmul.mubr.bf16.gmra.mxu0 %v386
      %v443 = vpop.f32.mrf.mxu0
      %v444 = vadd.f32 %v370, %v443
      %v445 = vpop.f32.mrf.mxu0
      %v446 = vpop.f32.mrf.mxu0
      %v447 = vadd.f32 %v370, %v446
      %v448 = vpop.f32.mrf.mxu0
      %449 = vmatprep.mubr.bf16.mxu0 0
      %450 = vmatmul.mubr.bf16.gmra.mxu0 %v389
      %v451 = vpop.f32.mrf.mxu0
      %v452 = vadd.f32 %v370, %v451
      %v453 = vpop.f32.mrf.mxu0
      %v454 = vpop.f32.mrf.mxu0
      %v455 = vadd.f32 %v370, %v454
      %v456 = vpop.f32.mrf.mxu0
      %457 = vmatprep.mubr.bf16.mxu0 0
      %458 = vmatmul.mubr.bf16.gmra.mxu0 %v392
      %v459 = vpop.f32.mrf.mxu0
      %v460 = vadd.f32 %v370, %v459
      %v461 = vpop.f32.mrf.mxu0
      %v462 = vpop.f32.mrf.mxu0
      %v463 = vadd.f32 %v370, %v462
      %v464 = vpop.f32.mrf.mxu0
      %465 = vmatprep.mubr.bf16.mxu0 0
      %466 = vmatmul.mubr.bf16.gmra.mxu0 %v395
      %v467 = vpop.f32.mrf.mxu0
      %v468 = vadd.f32 %v370, %v467
      %v469 = vpop.f32.mrf.mxu0
      %v470 = vpop.f32.mrf.mxu0
      %v471 = vadd.f32 %v370, %v470
      %v472 = vpop.f32.mrf.mxu0
      %473 = vmatprep.mubr.bf16.mxu0 0
      %474 = vmatmul.mubr.bf16.gmra.mxu0 %v398
      %v475 = vpop.f32.mrf.mxu0
      %v476 = vadd.f32 %v370, %v475
      %v477 = vpop.f32.mrf.mxu0
      %v478 = vpop.f32.mrf.mxu0
      %v479 = vadd.f32 %v370, %v478
      %v480 = vpop.f32.mrf.mxu0
      %481 = vmatprep.mubr.bf16.mxu0 0
      %482 = vmatmul.mubr.bf16.gmra.mxu0 %v401
      %v483 = vpop.f32.mrf.mxu0
      %v484 = vadd.f32 %v370, %v483
      %v485 = vpop.f32.mrf.mxu0
      %v486 = vpop.f32.mrf.mxu0
      %v487 = vadd.f32 %v370, %v486
      %v488 = vpop.f32.mrf.mxu0
      %489 = vmatprep.mubr.bf16.mxu0 0
      %490 = vmatmul.mubr.bf16.gmra.mxu0 %v404
      %v491 = vpop.f32.mrf.mxu0
      %v492 = vadd.f32 %v370, %v491
      %v493 = vpop.f32.mrf.mxu0
      %v494 = vpop.f32.mrf.mxu0
      %v495 = vadd.f32 %v370, %v494
      %v496 = vpop.f32.mrf.mxu0
      %497 = vmatprep.mubr.bf16.mxu0 0
      %498 = vmatmul.mubr.bf16.gmra.mxu0 %v407
      %v499 = vpop.f32.mrf.mxu0
      %v500 = vadd.f32 %v370, %v499
      %v501 = vpop.f32.mrf.mxu0
      %v502 = vpop.f32.mrf.mxu0
      %v503 = vadd.f32 %v370, %v502
      %v504 = vpop.f32.mrf.mxu0
      %505 = vdwg.mxu0
      %vm506 = vcmp.ge.f32.partialorder %v444, 0.0
      %vm507 = vcmp.ge.f32.partialorder %v447, 0.0
      %vm508 = vcmp.ge.f32.partialorder %v452, 0.0
      %vm509 = vcmp.ge.f32.partialorder %v455, 0.0
      %vm510 = vcmp.ge.f32.partialorder %v460, 0.0
      %vm511 = vcmp.ge.f32.partialorder %v463, 0.0
      %vm512 = vcmp.ge.f32.partialorder %v468, 0.0
      %vm513 = vcmp.ge.f32.partialorder %v471, 0.0
      %vm514 = vcmp.ge.f32.partialorder %v476, 0.0
      %vm515 = vcmp.ge.f32.partialorder %v479, 0.0
      %vm516 = vcmp.ge.f32.partialorder %v484, 0.0
      %vm517 = vcmp.ge.f32.partialorder %v487, 0.0
      %vm518 = vcmp.ge.f32.partialorder %v492, 0.0
      %vm519 = vcmp.ge.f32.partialorder %v495, 0.0
      %vm520 = vcmp.ge.f32.partialorder %v500, 0.0
      %vm521 = vcmp.ge.f32.partialorder %v503, 0.0
      %v522 = vmul.f32 %v444, 0.2
      %v523 = vmul.f32 %v447, 0.2
      %v524 = vmul.f32 %v452, 0.2
      %v525 = vmul.f32 %v455, 0.2
      %v526 = vmul.f32 %v460, 0.2
      %v527 = vmul.f32 %v463, 0.2
      %v528 = vmul.f32 %v468, 0.2
      %v529 = vmul.f32 %v471, 0.2
      %v530 = vmul.f32 %v476, 0.2
      %v531 = vmul.f32 %v479, 0.2
      %v532 = vmul.f32 %v484, 0.2
      %v533 = vmul.f32 %v487, 0.2
      %v534 = vmul.f32 %v492, 0.2
      %v535 = vmul.f32 %v495, 0.2
      %v536 = vmul.f32 %v500, 0.2
      %v537 = vmul.f32 %v503, 0.2
      %v538 = vsel %vm506, %v444, %v522
      %v539 = vsel %vm507, %v447, %v523
      %v540 = vsel %vm508, %v452, %v524
      %v541 = vsel %vm509, %v455, %v525
      %v542 = vsel %vm510, %v460, %v526
      %v543 = vsel %vm511, %v463, %v527
      %v544 = vsel %vm512, %v468, %v528
      %v545 = vsel %vm513, %v471, %v529
      %v546 = vsel %vm514, %v476, %v530
      %v547 = vsel %vm515, %v479, %v531
      %v548 = vsel %vm516, %v484, %v532
      %v549 = vsel %vm517, %v487, %v533
      %v550 = vsel %vm518, %v492, %v534
      %v551 = vsel %vm519, %v495, %v535
      %v552 = vsel %vm520, %v500, %v536
      %v553 = vsel %vm521, %v503, %v537
      %v554 = vpack.c.bf16 %v539, %v538
      %v555 = vpack.c.bf16 %v541, %v540
      %v556 = vpack.c.bf16 %v543, %v542
      %v557 = vpack.c.bf16 %v545, %v544
      %v558 = vpack.c.bf16 %v547, %v546
      %v559 = vpack.c.bf16 %v549, %v548
      %v560 = vpack.c.bf16 %v551, %v550
      %v561 = vpack.c.bf16 %v553, %v552
      %v562 = vld [vmem:[%s3] sm:$0xf]
      %v563 = vld [vmem:[%s3 + $0x4] sm:$0xf]
      %v564 = vld [vmem:[%s3 + $0x8] sm:$0xf]
      %v565 = vld [vmem:[%s3 + $0xc] sm:$0xf]
      %v566 = vld [vmem:[%s3 + $0x10] sm:$0xf]
      %v567 = vld [vmem:[%s3 + $0x14] sm:$0xf]
      %v568 = vld [vmem:[%s3 + $0x18] sm:$0xf]
      %v569 = vld [vmem:[%s3 + $0x1c] sm:$0xf]
      %v570 = vld [vmem:[%s4] sm:$0x1]
      %v572 = vlaneseq
      %v573 = vshrl.u32 %v572, 7
      %v574 = vsub.s32 0, %v573
      %v575 = vrot.slane %v570, %v574
      %v585 = vunpack.c.l.b16 %v562
      %v586 = vunpack.c.l.b16 %v563
      %v587 = vunpack.c.l.b16 %v564
      %v588 = vunpack.c.l.b16 %v565
      %v589 = vunpack.c.l.b16 %v566
      %v590 = vunpack.c.l.b16 %v567
      %v591 = vunpack.c.l.b16 %v568
      %v592 = vunpack.c.l.b16 %v569
      %v593 = vpack.c.b16 %v586, %v585
      %v594 = vpack.c.b16 %v588, %v587
      %v595 = vpack.c.b16 %v590, %v589
      %v596 = vpack.c.b16 %v592, %v591
      %vm601 = vcmask 523264
      %v603 = vsel %vm601, %v554, 0
      %v606 = vsel %vm601, %v555, 0
      %v609 = vsel %vm601, %v556, 0
      %v612 = vsel %vm601, %v557, 0
      %v615 = vsel %vm601, %v558, 0
      %v618 = vsel %vm601, %v559, 0
      %v621 = vsel %vm601, %v560, 0
      %v624 = vsel %vm601, %v561, 0
      %626 = vmatprep.subr.bf16.mxu0 0
      %627 = vmatpush1.bf16.msra.mxu0 0
      %628 = vmatprep.subr.bf16.mxu0 0
      %629 = vmatpush1.bf16.msra.mxu0 0
      %630 = vmatprep.subr.bf16.mxu0 0
      %631 = vmatpush1.bf16.msra.mxu0 0
      %632 = vmatprep.subr.bf16.mxu0 0
      %633 = vmatpush1.bf16.msra.mxu0 0
      %634 = vmatprep.subr.bf16.mxu0 0
      %635 = vmatpush1.bf16.msra.mxu0 %v596
      %636 = vmatprep.subr.bf16.mxu0 0
      %637 = vmatpush1.bf16.msra.mxu0 %v595
      %638 = vmatprep.subr.bf16.mxu0 0
      %639 = vmatpush1.bf16.msra.mxu0 %v594
      %640 = vmatprep.subr.bf16.mxu0 0
      %641 = vmatpush1.bf16.msra.mxu0 %v593
      %642 = vmatprep.subr.bf16.mxu0 0
      %643 = vmatpush2.bf16.msra.mxu0 0
      %644 = vmatprep.subr.bf16.mxu0 0
      %645 = vmatpush2.bf16.msra.mxu0 0
      %646 = vmatprep.subr.bf16.mxu0 0
      %647 = vmatpush2.bf16.msra.mxu0 0
      %648 = vmatprep.subr.bf16.mxu0 0
      %649 = vmatpush2.bf16.msra.mxu0 0
      %650 = vmatprep.subr.bf16.mxu0 0
      %651 = vmatpush2.bf16.msra.mxu0 0
      %652 = vmatprep.subr.bf16.mxu0 0
      %653 = vmatpush2.bf16.msra.mxu0 0
      %654 = vmatprep.subr.bf16.mxu0 0
      %655 = vmatpush2.bf16.msra.mxu0 0
      %656 = vmatprep.subr.bf16.mxu0 0
      %657 = vmatpush2.bf16.msra.mxu0 0
      %658 = vmatprep.mubr.bf16.mxu0 0
      %659 = vmatmul.mubr.bf16.gmra.mxu0 %v603
      %v660 = vpop.f32.mrf.mxu0
      %v661 = vadd.f32 %v575, %v660
      %v662 = vpop.f32.mrf.mxu0
      %v663 = vpop.f32.mrf.mxu0
      %v664 = vadd.f32 %v575, %v663
      %v665 = vpop.f32.mrf.mxu0
      %666 = vmatprep.mubr.bf16.mxu0 0
      %667 = vmatmul.mubr.bf16.gmra.mxu0 %v606
      %v668 = vpop.f32.mrf.mxu0
      %v669 = vadd.f32 %v575, %v668
      %v670 = vpop.f32.mrf.mxu0
      %v671 = vpop.f32.mrf.mxu0
      %v672 = vadd.f32 %v575, %v671
      %v673 = vpop.f32.mrf.mxu0
      %674 = vmatprep.mubr.bf16.mxu0 0
      %675 = vmatmul.mubr.bf16.gmra.mxu0 %v609
      %v676 = vpop.f32.mrf.mxu0
      %v677 = vadd.f32 %v575, %v676
      %v678 = vpop.f32.mrf.mxu0
      %v679 = vpop.f32.mrf.mxu0
      %v680 = vadd.f32 %v575, %v679
      %v681 = vpop.f32.mrf.mxu0
      %682 = vmatprep.mubr.bf16.mxu0 0
      %683 = vmatmul.mubr.bf16.gmra.mxu0 %v612
      %v684 = vpop.f32.mrf.mxu0
      %v685 = vadd.f32 %v575, %v684
      %v686 = vpop.f32.mrf.mxu0
      %v687 = vpop.f32.mrf.mxu0
      %v688 = vadd.f32 %v575, %v687
      %v689 = vpop.f32.mrf.mxu0
      %690 = vmatprep.mubr.bf16.mxu0 0
      %691 = vmatmul.mubr.bf16.gmra.mxu0 %v615
      %v692 = vpop.f32.mrf.mxu0
      %v693 = vadd.f32 %v575, %v692
      %v694 = vpop.f32.mrf.mxu0
      %v695 = vpop.f32.mrf.mxu0
      %v696 = vadd.f32 %v575, %v695
      %v697 = vpop.f32.mrf.mxu0
      %698 = vmatprep.mubr.bf16.mxu0 0
      %699 = vmatmul.mubr.bf16.gmra.mxu0 %v618
      %v700 = vpop.f32.mrf.mxu0
      %v701 = vadd.f32 %v575, %v700
      %v702 = vpop.f32.mrf.mxu0
      %v703 = vpop.f32.mrf.mxu0
      %v704 = vadd.f32 %v575, %v703
      %v705 = vpop.f32.mrf.mxu0
      %706 = vmatprep.mubr.bf16.mxu0 0
      %707 = vmatmul.mubr.bf16.gmra.mxu0 %v621
      %v708 = vpop.f32.mrf.mxu0
      %v709 = vadd.f32 %v575, %v708
      %v710 = vpop.f32.mrf.mxu0
      %v711 = vpop.f32.mrf.mxu0
      %v712 = vadd.f32 %v575, %v711
      %v713 = vpop.f32.mrf.mxu0
      %714 = vmatprep.mubr.bf16.mxu0 0
      %715 = vmatmul.mubr.bf16.gmra.mxu0 %v624
      %v716 = vpop.f32.mrf.mxu0
      %v717 = vadd.f32 %v575, %v716
      %v718 = vpop.f32.mrf.mxu0
      %v719 = vpop.f32.mrf.mxu0
      %v720 = vadd.f32 %v575, %v719
      %v721 = vpop.f32.mrf.mxu0
      %722 = vdwg.mxu0
      %vm723 = vcmp.ge.f32.partialorder %v661, 0.0
      %vm724 = vcmp.ge.f32.partialorder %v664, 0.0
      %vm725 = vcmp.ge.f32.partialorder %v669, 0.0
      %vm726 = vcmp.ge.f32.partialorder %v672, 0.0
      %vm727 = vcmp.ge.f32.partialorder %v677, 0.0
      %vm728 = vcmp.ge.f32.partialorder %v680, 0.0
      %vm729 = vcmp.ge.f32.partialorder %v685, 0.0
      %vm730 = vcmp.ge.f32.partialorder %v688, 0.0
      %vm731 = vcmp.ge.f32.partialorder %v693, 0.0
      %vm732 = vcmp.ge.f32.partialorder %v696, 0.0
      %vm733 = vcmp.ge.f32.partialorder %v701, 0.0
      %vm734 = vcmp.ge.f32.partialorder %v704, 0.0
      %vm735 = vcmp.ge.f32.partialorder %v709, 0.0
      %vm736 = vcmp.ge.f32.partialorder %v712, 0.0
      %vm737 = vcmp.ge.f32.partialorder %v717, 0.0
      %vm738 = vcmp.ge.f32.partialorder %v720, 0.0
      %v739 = vmul.f32 %v661, 0.2
      %v740 = vmul.f32 %v664, 0.2
      %v741 = vmul.f32 %v669, 0.2
      %v742 = vmul.f32 %v672, 0.2
      %v743 = vmul.f32 %v677, 0.2
      %v744 = vmul.f32 %v680, 0.2
      %v745 = vmul.f32 %v685, 0.2
      %v746 = vmul.f32 %v688, 0.2
      %v747 = vmul.f32 %v693, 0.2
      %v748 = vmul.f32 %v696, 0.2
      %v749 = vmul.f32 %v701, 0.2
      %v750 = vmul.f32 %v704, 0.2
      %v751 = vmul.f32 %v709, 0.2
      %v752 = vmul.f32 %v712, 0.2
      %v753 = vmul.f32 %v717, 0.2
      %v754 = vmul.f32 %v720, 0.2
      %v755 = vsel %vm723, %v661, %v739
      %v756 = vsel %vm724, %v664, %v740
      %v757 = vsel %vm725, %v669, %v741
      %v758 = vsel %vm726, %v672, %v742
      %v759 = vsel %vm727, %v677, %v743
      %v760 = vsel %vm728, %v680, %v744
      %v761 = vsel %vm729, %v685, %v745
      %v762 = vsel %vm730, %v688, %v746
      %v763 = vsel %vm731, %v693, %v747
      %v764 = vsel %vm732, %v696, %v748
      %v765 = vsel %vm733, %v701, %v749
      %v766 = vsel %vm734, %v704, %v750
      %v767 = vsel %vm735, %v709, %v751
      %v768 = vsel %vm736, %v712, %v752
      %v769 = vsel %vm737, %v717, %v753
      %v770 = vsel %vm738, %v720, %v754
      %v771 = vpack.c.bf16 %v756, %v755
      %v772 = vpack.c.bf16 %v758, %v757
      %v773 = vpack.c.bf16 %v760, %v759
      %v774 = vpack.c.bf16 %v762, %v761
      %v775 = vpack.c.bf16 %v764, %v763
      %v776 = vpack.c.bf16 %v766, %v765
      %v777 = vpack.c.bf16 %v768, %v767
      %v778 = vpack.c.bf16 %v770, %v769
      %v779 = vld [vmem:[%s5] sm:$0xf]
      %v780 = vld [vmem:[%s5 + $0x4] sm:$0xf]
      %v781 = vld [vmem:[%s5 + $0x8] sm:$0xf]
      %v782 = vld [vmem:[%s5 + $0xc] sm:$0xf]
      %v783 = vld [vmem:[%s5 + $0x10] sm:$0xf]
      %v784 = vld [vmem:[%s5 + $0x14] sm:$0xf]
      %v785 = vld [vmem:[%s5 + $0x18] sm:$0xf]
      %v786 = vld [vmem:[%s5 + $0x1c] sm:$0xf]
      %v787 = vld [vmem:[%s5 + $0x20] sm:$0xf]
      %v788 = vld [vmem:[%s5 + $0x24] sm:$0xf]
      %v789 = vld [vmem:[%s5 + $0x28] sm:$0xf]
      %v790 = vld [vmem:[%s5 + $0x2c] sm:$0xf]
      %v791 = vld [vmem:[%s5 + $0x30] sm:$0xf]
      %v792 = vld [vmem:[%s5 + $0x34] sm:$0xf]
      %v793 = vld [vmem:[%s5 + $0x38] sm:$0xf]
      %v794 = vld [vmem:[%s5 + $0x3c] sm:$0xf]
      %v795 = vld [vmem:[%s6] sm:$0x1]
      %v797 = vlaneseq
      %v798 = vshrl.u32 %v797, 7
      %v799 = vsub.s32 0, %v798
      %v800 = vrot.slane %v795, %v799
      %v818 = vunpack.c.l.b16 %v779
      %v819 = vunpack.c.l.b16 %v780
      %v820 = vunpack.c.l.b16 %v781
      %v821 = vunpack.c.l.b16 %v782
      %v822 = vunpack.c.l.b16 %v783
      %v823 = vunpack.c.l.b16 %v784
      %v824 = vunpack.c.l.b16 %v785
      %v825 = vunpack.c.l.b16 %v786
      %v826 = vunpack.c.l.b16 %v787
      %v827 = vunpack.c.l.b16 %v788
      %v828 = vunpack.c.l.b16 %v789
      %v829 = vunpack.c.l.b16 %v790
      %v830 = vunpack.c.l.b16 %v791
      %v831 = vunpack.c.l.b16 %v792
      %v832 = vunpack.c.l.b16 %v793
      %v833 = vunpack.c.l.b16 %v794
      %v834 = vpack.c.b16 %v819, %v818
      %v835 = vpack.c.b16 %v821, %v820
      %v836 = vpack.c.b16 %v823, %v822
      %v837 = vpack.c.b16 %v825, %v824
      %v838 = vpack.c.b16 %v827, %v826
      %v839 = vpack.c.b16 %v829, %v828
      %v840 = vpack.c.b16 %v831, %v830
      %v841 = vpack.c.b16 %v833, %v832
      %850 = vmatprep.subr.bf16.mxu0 0
      %851 = vmatpush1.bf16.msra.mxu0 %v841
      %852 = vmatprep.subr.bf16.mxu0 0
      %853 = vmatpush1.bf16.msra.mxu0 %v840
      %854 = vmatprep.subr.bf16.mxu0 0
      %855 = vmatpush1.bf16.msra.mxu0 %v839
      %856 = vmatprep.subr.bf16.mxu0 0
      %857 = vmatpush1.bf16.msra.mxu0 %v838
      %858 = vmatprep.subr.bf16.mxu0 0
      %859 = vmatpush1.bf16.msra.mxu0 %v837
      %860 = vmatprep.subr.bf16.mxu0 0
      %861 = vmatpush1.bf16.msra.mxu0 %v836
      %862 = vmatprep.subr.bf16.mxu0 0
      %863 = vmatpush1.bf16.msra.mxu0 %v835
      %864 = vmatprep.subr.bf16.mxu0 0
      %865 = vmatpush1.bf16.msra.mxu0 %v834
      %866 = vmatprep.subr.bf16.mxu0 0
      %867 = vmatpush2.bf16.msra.mxu0 0
      %868 = vmatprep.subr.bf16.mxu0 0
      %869 = vmatpush2.bf16.msra.mxu0 0
      %870 = vmatprep.subr.bf16.mxu0 0
      %871 = vmatpush2.bf16.msra.mxu0 0
      %872 = vmatprep.subr.bf16.mxu0 0
      %873 = vmatpush2.bf16.msra.mxu0 0
      %874 = vmatprep.subr.bf16.mxu0 0
      %875 = vmatpush2.bf16.msra.mxu0 0
      %876 = vmatprep.subr.bf16.mxu0 0
      %877 = vmatpush2.bf16.msra.mxu0 0
      %878 = vmatprep.subr.bf16.mxu0 0
      %879 = vmatpush2.bf16.msra.mxu0 0
      %880 = vmatprep.subr.bf16.mxu0 0
      %881 = vmatpush2.bf16.msra.mxu0 0
      %882 = vmatprep.mubr.bf16.mxu0 0
      %883 = vmatmul.mubr.bf16.gmra.mxu0 %v771
      %v884 = vpop.f32.mrf.mxu0
      %v885 = vadd.f32 %v800, %v884
      %v886 = vpop.f32.mrf.mxu0
      %v887 = vpop.f32.mrf.mxu0
      %v888 = vadd.f32 %v800, %v887
      %v889 = vpop.f32.mrf.mxu0
      %890 = vmatprep.mubr.bf16.mxu0 0
      %891 = vmatmul.mubr.bf16.gmra.mxu0 %v772
      %v892 = vpop.f32.mrf.mxu0
      %v893 = vadd.f32 %v800, %v892
      %v894 = vpop.f32.mrf.mxu0
      %v895 = vpop.f32.mrf.mxu0
      %v896 = vadd.f32 %v800, %v895
      %v897 = vpop.f32.mrf.mxu0
      %898 = vmatprep.mubr.bf16.mxu0 0
      %899 = vmatmul.mubr.bf16.gmra.mxu0 %v773
      %v900 = vpop.f32.mrf.mxu0
      %v901 = vadd.f32 %v800, %v900
      %v902 = vpop.f32.mrf.mxu0
      %v903 = vpop.f32.mrf.mxu0
      %v904 = vadd.f32 %v800, %v903
      %v905 = vpop.f32.mrf.mxu0
      %906 = vmatprep.mubr.bf16.mxu0 0
      %907 = vmatmul.mubr.bf16.gmra.mxu0 %v774
      %v908 = vpop.f32.mrf.mxu0
      %v909 = vadd.f32 %v800, %v908
      %v910 = vpop.f32.mrf.mxu0
      %v911 = vpop.f32.mrf.mxu0
      %v912 = vadd.f32 %v800, %v911
      %v913 = vpop.f32.mrf.mxu0
      %914 = vmatprep.mubr.bf16.mxu0 0
      %915 = vmatmul.mubr.bf16.gmra.mxu0 %v775
      %v916 = vpop.f32.mrf.mxu0
      %v917 = vadd.f32 %v800, %v916
      %v918 = vpop.f32.mrf.mxu0
      %v919 = vpop.f32.mrf.mxu0
      %v920 = vadd.f32 %v800, %v919
      %v921 = vpop.f32.mrf.mxu0
      %922 = vmatprep.mubr.bf16.mxu0 0
      %923 = vmatmul.mubr.bf16.gmra.mxu0 %v776
      %v924 = vpop.f32.mrf.mxu0
      %v925 = vadd.f32 %v800, %v924
      %v926 = vpop.f32.mrf.mxu0
      %v927 = vpop.f32.mrf.mxu0
      %v928 = vadd.f32 %v800, %v927
      %v929 = vpop.f32.mrf.mxu0
      %930 = vmatprep.mubr.bf16.mxu0 0
      %931 = vmatmul.mubr.bf16.gmra.mxu0 %v777
      %v932 = vpop.f32.mrf.mxu0
      %v933 = vadd.f32 %v800, %v932
      %v934 = vpop.f32.mrf.mxu0
      %v935 = vpop.f32.mrf.mxu0
      %v936 = vadd.f32 %v800, %v935
      %v937 = vpop.f32.mrf.mxu0
      %938 = vmatprep.mubr.bf16.mxu0 0
      %939 = vmatmul.mubr.bf16.gmra.mxu0 %v778
      %v940 = vpop.f32.mrf.mxu0
      %v941 = vadd.f32 %v800, %v940
      %v942 = vpop.f32.mrf.mxu0
      %v943 = vpop.f32.mrf.mxu0
      %v944 = vadd.f32 %v800, %v943
      %v945 = vpop.f32.mrf.mxu0
      %946 = vdwg.mxu0
      %vm947 = vcmp.ge.f32.partialorder %v885, 0.0
      %vm948 = vcmp.ge.f32.partialorder %v888, 0.0
      %vm949 = vcmp.ge.f32.partialorder %v893, 0.0
      %vm950 = vcmp.ge.f32.partialorder %v896, 0.0
      %vm951 = vcmp.ge.f32.partialorder %v901, 0.0
      %vm952 = vcmp.ge.f32.partialorder %v904, 0.0
      %vm953 = vcmp.ge.f32.partialorder %v909, 0.0
      %vm954 = vcmp.ge.f32.partialorder %v912, 0.0
      %vm955 = vcmp.ge.f32.partialorder %v917, 0.0
      %vm956 = vcmp.ge.f32.partialorder %v920, 0.0
      %vm957 = vcmp.ge.f32.partialorder %v925, 0.0
      %vm958 = vcmp.ge.f32.partialorder %v928, 0.0
      %vm959 = vcmp.ge.f32.partialorder %v933, 0.0
      %vm960 = vcmp.ge.f32.partialorder %v936, 0.0
      %vm961 = vcmp.ge.f32.partialorder %v941, 0.0
      %vm962 = vcmp.ge.f32.partialorder %v944, 0.0
      %v963 = vmul.f32 %v885, 0.2
      %v964 = vmul.f32 %v888, 0.2
      %v965 = vmul.f32 %v893, 0.2
      %v966 = vmul.f32 %v896, 0.2
      %v967 = vmul.f32 %v901, 0.2
      %v968 = vmul.f32 %v904, 0.2
      %v969 = vmul.f32 %v909, 0.2
      %v970 = vmul.f32 %v912, 0.2
      %v971 = vmul.f32 %v917, 0.2
      %v972 = vmul.f32 %v920, 0.2
      %v973 = vmul.f32 %v925, 0.2
      %v974 = vmul.f32 %v928, 0.2
      %v975 = vmul.f32 %v933, 0.2
      %v976 = vmul.f32 %v936, 0.2
      %v977 = vmul.f32 %v941, 0.2
      %v978 = vmul.f32 %v944, 0.2
      %v979 = vsel %vm947, %v885, %v963
      %v980 = vsel %vm948, %v888, %v964
      %v981 = vsel %vm949, %v893, %v965
      %v982 = vsel %vm950, %v896, %v966
      %v983 = vsel %vm951, %v901, %v967
      %v984 = vsel %vm952, %v904, %v968
      %v985 = vsel %vm953, %v909, %v969
      %v986 = vsel %vm954, %v912, %v970
      %v987 = vsel %vm955, %v917, %v971
      %v988 = vsel %vm956, %v920, %v972
      %v989 = vsel %vm957, %v925, %v973
      %v990 = vsel %vm958, %v928, %v974
      %v991 = vsel %vm959, %v933, %v975
      %v992 = vsel %vm960, %v936, %v976
      %v993 = vsel %vm961, %v941, %v977
      %v994 = vsel %vm962, %v944, %v978
      %vm995 = vcmp.ge.f32.partialorder %v979, 0.0
      %vm996 = vcmp.ge.f32.partialorder %v980, 0.0
      %vm997 = vcmp.ge.f32.partialorder %v981, 0.0
      %vm998 = vcmp.ge.f32.partialorder %v982, 0.0
      %vm999 = vcmp.ge.f32.partialorder %v983, 0.0
      %vm1000 = vcmp.ge.f32.partialorder %v984, 0.0
      %vm1001 = vcmp.ge.f32.partialorder %v985, 0.0
      %vm1002 = vcmp.ge.f32.partialorder %v986, 0.0
      %vm1003 = vcmp.ge.f32.partialorder %v987, 0.0
      %vm1004 = vcmp.ge.f32.partialorder %v988, 0.0
      %vm1005 = vcmp.ge.f32.partialorder %v989, 0.0
      %vm1006 = vcmp.ge.f32.partialorder %v990, 0.0
      %vm1007 = vcmp.ge.f32.partialorder %v991, 0.0
      %vm1008 = vcmp.ge.f32.partialorder %v992, 0.0
      %vm1009 = vcmp.ge.f32.partialorder %v993, 0.0
      %vm1010 = vcmp.ge.f32.partialorder %v994, 0.0
      %v1011 = vmul.f32 %v979, 0.2
      %v1012 = vmul.f32 %v980, 0.2
      %v1013 = vmul.f32 %v981, 0.2
      %v1014 = vmul.f32 %v982, 0.2
      %v1015 = vmul.f32 %v983, 0.2
      %v1016 = vmul.f32 %v984, 0.2
      %v1017 = vmul.f32 %v985, 0.2
      %v1018 = vmul.f32 %v986, 0.2
      %v1019 = vmul.f32 %v987, 0.2
      %v1020 = vmul.f32 %v988, 0.2
      %v1021 = vmul.f32 %v989, 0.2
      %v1022 = vmul.f32 %v990, 0.2
      %v1023 = vmul.f32 %v991, 0.2
      %v1024 = vmul.f32 %v992, 0.2
      %v1025 = vmul.f32 %v993, 0.2
      %v1026 = vmul.f32 %v994, 0.2
      %v1027 = vsel %vm995, %v979, %v1011
      %v1028 = vsel %vm996, %v980, %v1012
      %v1029 = vsel %vm997, %v981, %v1013
      %v1030 = vsel %vm998, %v982, %v1014
      %v1031 = vsel %vm999, %v983, %v1015
      %v1032 = vsel %vm1000, %v984, %v1016
      %v1033 = vsel %vm1001, %v985, %v1017
      %v1034 = vsel %vm1002, %v986, %v1018
      %v1035 = vsel %vm1003, %v987, %v1019
      %v1036 = vsel %vm1004, %v988, %v1020
      %v1037 = vsel %vm1005, %v989, %v1021
      %v1038 = vsel %vm1006, %v990, %v1022
      %v1039 = vsel %vm1007, %v991, %v1023
      %v1040 = vsel %vm1008, %v992, %v1024
      %v1041 = vsel %vm1009, %v993, %v1025
      %v1042 = vsel %vm1010, %v994, %v1026
      %v1043 = vpack.c.bf16 %v1028, %v1027
      %v1044 = vpack.c.bf16 %v1030, %v1029
      %v1045 = vpack.c.bf16 %v1032, %v1031
      %v1046 = vpack.c.bf16 %v1034, %v1033
      %v1047 = vpack.c.bf16 %v1036, %v1035
      %v1048 = vpack.c.bf16 %v1038, %v1037
      %v1049 = vpack.c.bf16 %v1040, %v1039
      %v1050 = vpack.c.bf16 %v1042, %v1041
      %v1051 = vld [vmem:[%s7] sm:$0xf]
      %v1052 = vld [vmem:[%s7 + $0x4] sm:$0xf]
      %v1053 = vld [vmem:[%s7 + $0x8] sm:$0xf]
      %v1054 = vld [vmem:[%s7 + $0xc] sm:$0xf]
      %v1055 = vld [vmem:[%s7 + $0x10] sm:$0xf]
      %v1056 = vld [vmem:[%s7 + $0x14] sm:$0xf]
      %v1057 = vld [vmem:[%s7 + $0x18] sm:$0xf]
      %v1058 = vld [vmem:[%s7 + $0x1c] sm:$0xf]
      %v1059 = vld [vmem:[%s8] sm:$0x1]
      %v1061 = vlaneseq
      %v1062 = vshrl.u32 %v1061, 7
      %v1063 = vsub.s32 0, %v1062
      %v1064 = vrot.slane %v1059, %v1063
      %v1074 = vunpack.c.l.b16 %v1051
      %v1075 = vunpack.c.l.b16 %v1052
      %v1076 = vunpack.c.l.b16 %v1053
      %v1077 = vunpack.c.l.b16 %v1054
      %v1078 = vunpack.c.l.b16 %v1055
      %v1079 = vunpack.c.l.b16 %v1056
      %v1080 = vunpack.c.l.b16 %v1057
      %v1081 = vunpack.c.l.b16 %v1058
      %v1082 = vpack.c.b16 %v1075, %v1074
      %v1083 = vpack.c.b16 %v1077, %v1076
      %v1084 = vpack.c.b16 %v1079, %v1078
      %v1085 = vpack.c.b16 %v1081, %v1080
      %v1091 = vsel %vm601, %v1043, 0
      %v1094 = vsel %vm601, %v1044, 0
      %v1097 = vsel %vm601, %v1045, 0
      %v1100 = vsel %vm601, %v1046, 0
      %v1103 = vsel %vm601, %v1047, 0
      %v1106 = vsel %vm601, %v1048, 0
      %v1109 = vsel %vm601, %v1049, 0
      %v1112 = vsel %vm601, %v1050, 0
      %1114 = vmatprep.subr.bf16.mxu0 0
      %1115 = vmatpush1.bf16.msra.mxu0 0
      %1116 = vmatprep.subr.bf16.mxu0 0
      %1117 = vmatpush1.bf16.msra.mxu0 0
      %1118 = vmatprep.subr.bf16.mxu0 0
      %1119 = vmatpush1.bf16.msra.mxu0 0
      %1120 = vmatprep.subr.bf16.mxu0 0
      %1121 = vmatpush1.bf16.msra.mxu0 0
      %1122 = vmatprep.subr.bf16.mxu0 0
      %1123 = vmatpush1.bf16.msra.mxu0 %v1085
      %1124 = vmatprep.subr.bf16.mxu0 0
      %1125 = vmatpush1.bf16.msra.mxu0 %v1084
      %1126 = vmatprep.subr.bf16.mxu0 0
      %1127 = vmatpush1.bf16.msra.mxu0 %v1083
      %1128 = vmatprep.subr.bf16.mxu0 0
      %1129 = vmatpush1.bf16.msra.mxu0 %v1082
      %1130 = vmatprep.subr.bf16.mxu0 0
      %1131 = vmatpush2.bf16.msra.mxu0 0
      %1132 = vmatprep.subr.bf16.mxu0 0
      %1133 = vmatpush2.bf16.msra.mxu0 0
      %1134 = vmatprep.subr.bf16.mxu0 0
      %1135 = vmatpush2.bf16.msra.mxu0 0
      %1136 = vmatprep.subr.bf16.mxu0 0
      %1137 = vmatpush2.bf16.msra.mxu0 0
      %1138 = vmatprep.subr.bf16.mxu0 0
      %1139 = vmatpush2.bf16.msra.mxu0 0
      %1140 = vmatprep.subr.bf16.mxu0 0
      %1141 = vmatpush2.bf16.msra.mxu0 0
      %1142 = vmatprep.subr.bf16.mxu0 0
      %1143 = vmatpush2.bf16.msra.mxu0 0
      %1144 = vmatprep.subr.bf16.mxu0 0
      %1145 = vmatpush2.bf16.msra.mxu0 0
      %1146 = vmatprep.mubr.bf16.mxu0 0
      %1147 = vmatmul.mubr.bf16.gmra.mxu0 %v1091
      %v1148 = vpop.f32.mrf.mxu0
      %v1149 = vadd.f32 %v1064, %v1148
      %v1150 = vpop.f32.mrf.mxu0
      %v1151 = vpop.f32.mrf.mxu0
      %v1152 = vadd.f32 %v1064, %v1151
      %v1153 = vpop.f32.mrf.mxu0
      %1154 = vmatprep.mubr.bf16.mxu0 0
      %1155 = vmatmul.mubr.bf16.gmra.mxu0 %v1094
      %v1156 = vpop.f32.mrf.mxu0
      %v1157 = vadd.f32 %v1064, %v1156
      %v1158 = vpop.f32.mrf.mxu0
      %v1159 = vpop.f32.mrf.mxu0
      %v1160 = vadd.f32 %v1064, %v1159
      %v1161 = vpop.f32.mrf.mxu0
      %1162 = vmatprep.mubr.bf16.mxu0 0
      %1163 = vmatmul.mubr.bf16.gmra.mxu0 %v1097
      %v1164 = vpop.f32.mrf.mxu0
      %v1165 = vadd.f32 %v1064, %v1164
      %v1166 = vpop.f32.mrf.mxu0
      %v1167 = vpop.f32.mrf.mxu0
      %v1168 = vadd.f32 %v1064, %v1167
      %v1169 = vpop.f32.mrf.mxu0
      %1170 = vmatprep.mubr.bf16.mxu0 0
      %1171 = vmatmul.mubr.bf16.gmra.mxu0 %v1100
      %v1172 = vpop.f32.mrf.mxu0
      %v1173 = vadd.f32 %v1064, %v1172
      %v1174 = vpop.f32.mrf.mxu0
      %v1175 = vpop.f32.mrf.mxu0
      %v1176 = vadd.f32 %v1064, %v1175
      %v1177 = vpop.f32.mrf.mxu0
      %1178 = vmatprep.mubr.bf16.mxu0 0
      %1179 = vmatmul.mubr.bf16.gmra.mxu0 %v1103
      %v1180 = vpop.f32.mrf.mxu0
      %v1181 = vadd.f32 %v1064, %v1180
      %v1182 = vpop.f32.mrf.mxu0
      %v1183 = vpop.f32.mrf.mxu0
      %v1184 = vadd.f32 %v1064, %v1183
      %v1185 = vpop.f32.mrf.mxu0
      %1186 = vmatprep.mubr.bf16.mxu0 0
      %1187 = vmatmul.mubr.bf16.gmra.mxu0 %v1106
      %v1188 = vpop.f32.mrf.mxu0
      %v1189 = vadd.f32 %v1064, %v1188
      %v1190 = vpop.f32.mrf.mxu0
      %v1191 = vpop.f32.mrf.mxu0
      %v1192 = vadd.f32 %v1064, %v1191
      %v1193 = vpop.f32.mrf.mxu0
      %1194 = vmatprep.mubr.bf16.mxu0 0
      %1195 = vmatmul.mubr.bf16.gmra.mxu0 %v1109
      %v1196 = vpop.f32.mrf.mxu0
      %v1197 = vadd.f32 %v1064, %v1196
      %v1198 = vpop.f32.mrf.mxu0
      %v1199 = vpop.f32.mrf.mxu0
      %v1200 = vadd.f32 %v1064, %v1199
      %v1201 = vpop.f32.mrf.mxu0
      %1202 = vmatprep.mubr.bf16.mxu0 0
      %1203 = vmatmul.mubr.bf16.gmra.mxu0 %v1112
      %v1204 = vpop.f32.mrf.mxu0
      %v1205 = vadd.f32 %v1064, %v1204
      %v1206 = vpop.f32.mrf.mxu0
      %v1207 = vpop.f32.mrf.mxu0
      %v1208 = vadd.f32 %v1064, %v1207
      %v1209 = vpop.f32.mrf.mxu0
      %1210 = vdwg.mxu0
      %v1211 = vtanh.pop %v1149
      %v1212 = vtanh.pop %v1152
      %v1213 = vtanh.pop %v1157
      %v1214 = vtanh.pop %v1160
      %v1215 = vtanh.pop %v1165
      %v1216 = vtanh.pop %v1168
      %v1217 = vtanh.pop %v1173
      %v1218 = vtanh.pop %v1176
      %v1219 = vtanh.pop %v1181
      %v1220 = vtanh.pop %v1184
      %v1221 = vtanh.pop %v1189
      %v1222 = vtanh.pop %v1192
      %v1223 = vtanh.pop %v1197
      %v1224 = vtanh.pop %v1200
      %v1225 = vtanh.pop %v1205
      %v1226 = vtanh.pop %v1208
      %1227 = vst.msk [vmem:[%s334] sm:$0xff] %vm384, %v1211
      %1228 = vst.msk [vmem:[%s334 + $0x8] sm:$0xff] %vm384, %v1212
      %1229 = vst.msk [vmem:[%s334 + $0x10] sm:$0xff] %vm384, %v1213
      %1230 = vst.msk [vmem:[%s334 + $0x18] sm:$0xff] %vm384, %v1214
      %1231 = vst.msk [vmem:[%s334 + $0x20] sm:$0xff] %vm384, %v1215
      %1232 = vst.msk [vmem:[%s334 + $0x28] sm:$0xff] %vm384, %v1216
      %1233 = vst.msk [vmem:[%s334 + $0x30] sm:$0xff] %vm384, %v1217
      %1234 = vst.msk [vmem:[%s334 + $0x38] sm:$0xff] %vm384, %v1218
      %1235 = vst.msk [vmem:[%s334 + $0x40] sm:$0xff] %vm384, %v1219
      %1236 = vst.msk [vmem:[%s334 + $0x48] sm:$0xff] %vm384, %v1220
      %1237 = vst.msk [vmem:[%s334 + $0x50] sm:$0xff] %vm384, %v1221
      %1238 = vst.msk [vmem:[%s334 + $0x58] sm:$0xff] %vm384, %v1222
      %1239 = vst.msk [vmem:[%s334 + $0x60] sm:$0xff] %vm384, %v1223
      %1240 = vst.msk [vmem:[%s334 + $0x68] sm:$0xff] %vm384, %v1224
      %1241 = vst.msk [vmem:[%s334 + $0x70] sm:$0xff] %vm384, %v1225
      %1242 = vst.msk [vmem:[%s334 + $0x78] sm:$0xff] %vm384, %v1226
      %s1243 = smul.u32 16, %s20
      %p1244 = scmp.lt.s32.totalorder %s1243, 31
      %s1245 = scalar_select %p1244, %s1243, 31
      %s1246 = smul.addr %s1245, 8
      %s1247 = scalar_lea.vmem %s9, %s1246
      // Predicated region
      $region57: #{generator_forward.1} parent=55 // pred_check
        %p1248 = pneg %p232
      $region58: #{generator_forward.1} parent=55 // pred_check_branch
        %1250 = sbr.rel (%p1248) target = $region60
      $region59: #{generator_forward.1} parent=55 // pred_region
        %s1251 = smul.u32 16, %s20
      $region60: #{generator_forward.1} parent=55 // pred_fallthru
        _
    $region56: #{generator_forward.1} parent=5 // pred_fallthru
      _
    %p1252 = scmp.le.s32.totalorder 2, %s15
    // Predicated region
    $region61: #{generator_forward.1} parent=5 // pred_check
      %p1253 = pneg %p1252
    $region62: #{generator_forward.1} parent=5 // pred_check_branch
      %1255 = sbr.rel (%p1253) target = $region64
    $region63: #{generator_forward.1} parent=5 // pred_region
      %s1256 = ssub.s32 %s15, 2
      // Predicated region
      $region65: #{generator_forward.1} parent=63 // pred_check
        %p1257 = pneg %p238
      $region66: #{generator_forward.1} parent=63 // pred_check_branch
        %1259 = sbr.rel (%p1257) target = $region68
      $region67: #{generator_forward.1} parent=63 // pred_region
        %s1260 = smul.u32 16, %s21
        %p1261 = scmp.lt.s32.totalorder %s1260, 31
        %s1262 = scalar_select %p1261, %s1260, 31
        %s1263 = smul.addr %s1262, 8
        %s1264 = scalar_lea.vmem %s9, %s1263
      $region68: #{generator_forward.1} parent=63 // pred_fallthru
        _
    $region64: #{generator_forward.1} parent=5 // pred_fallthru
      _
  $region6: #{generator_forward.1} parent=0 // loop_footer
    %s19 = sadd.s32 1, %s15
  $region7: #{generator_forward.1} parent=0 // loop_footer_branch
    %14 = sbr.rel target = $region3
  $region8: #{generator_forward.1} parent=0 // loop_exit
    _

</llo_original>
